<compile_context>
chip_gen: v7x
topology: tpu7x:2x2x1
jax: 0.10.0
libtpu: 0.0.40
codegen_flags: <defaults>
</compile_context>

<pallas_src>
import jax
import jax.numpy as jnp
from jax import lax
from jax.experimental import pallas as pl
from jax.experimental.pallas import tpu as pltpu


# 3x3 positions (ky, kx) of the 5 taps w0..w4 in the "diag cross" kernel.
_TAPS = ((0, 0), (0, 2), (1, 1), (2, 0), (2, 2))

# Interior rows of the halo scratch start at this sublane-aligned offset; the
# 1-row vertical halo lives at rows (_HALO_OFF - 1) and (_HALO_OFF + H).
_HALO_OFF = 8


def _diag_cross_kernel(x_ref, b_ref, o_ref, xp_ref):
    """One batch-block per grid step.

    x_ref  : (NB, H, W*C_in)        interleaved input rows
    b_ref  : (3, W*C_in, W*C_out)   banded per-row-offset mixing matrices
    o_ref  : (NB, H, W*C_out)       interleaved output rows (lane-dense)
    xp_ref : (NB, H_pad, W*C_in)    VMEM scratch: interior at rows [8, 8+H),
                                    zero halo rows at 7 and 8+H
    """
    nb, h, w_cin = x_ref.shape
    w_cout = o_ref.shape[2]
    t = _HALO_OFF

    # Zero ONLY the two halo rows (per batch element), every step.  Not done
    # once under @pl.when(program_id == 0): with "parallel" batch semantics a
    # second v7x TensorCore never executes grid index 0 and VMEM scratch is
    # per-core and not zero-initialized, so a one-time init would leave stale
    # halo rows on that core.  Cost: 2 rows vs H interior rows -> negligible.
    zrow = jnp.zeros((nb, 1, w_cin), dtype=xp_ref.dtype)
    xp_ref[:, t - 1:t, :] = zrow
    xp_ref[:, t + h:t + h + 1, :] = zrow

    # Interior copy at a sublane-aligned (multiple-of-8) row offset ->
    # unmasked full stores; replaces a wrapper-side jnp.pad (full HBM rewrite).
    xp_ref[:, t:t + h, :] = x_ref[...]

    # Three matmuls, one per vertical tap offset; horizontal offsets and the
    # W-boundary clipping are encoded in the banded matrices.  Accumulator is
    # initialized from the first dot (no output-sized zero buffer); f32
    # accumulation on the MXU.
    x_top = xp_ref[:, t - 1:t - 1 + h, :].reshape(nb * h, w_cin)
    x_mid = xp_ref[:, t:t + h, :].reshape(nb * h, w_cin)
    x_bot = xp_ref[:, t + 1:t + 1 + h, :].reshape(nb * h, w_cin)
    acc = jnp.dot(x_top, b_ref[0], preferred_element_type=jnp.float32)
    acc += jnp.dot(x_mid, b_ref[1], preferred_element_type=jnp.float32)
    acc += jnp.dot(x_bot, b_ref[2], preferred_element_type=jnp.float32)

    # Minor dim W*C_out stays intact -> cheap, lane-dense unmasked store.
    o_ref[...] = acc.reshape(nb, h, w_cout).astype(o_ref.dtype)


def _build_banded_weights(weight, theta, W):
    """(C_out, C_in, 1, 5) conv weight -> (3, W*C_in, W*C_out) banded matrices.

    B[ky][xin*C_in + ci, x*C_out + co] is the contribution of input pixel
    (row y+ky-1, column xin, channel ci) to output pixel (y, x, co).  The
    horizontal tap offsets and the W-boundary clipping are encoded by shifted
    identities, and theta * (1x1 diff conv) is folded into the centre tap.
    """
    # per-tap channel mixers, (5, C_in, C_out)
    w = jnp.transpose(weight[:, :, 0, :].astype(jnp.float32), (2, 1, 0))
    # theta-fold: the centre tap reads exactly the pixel the 1x1 conv reads.
    w = w.at[2].add(-float(theta) * jnp.sum(w, axis=0))

    eye = jnp.eye(W, dtype=jnp.float32)
    s_left = jnp.eye(W, k=1, dtype=jnp.float32)    # input col x-1 -> output col x (kx=0)
    s_right = jnp.eye(W, k=-1, dtype=jnp.float32)  # input col x+1 -> output col x (kx=2)

    b_top = jnp.kron(s_left, w[0]) + jnp.kron(s_right, w[1])   # ky = 0: taps w0, w1
    b_mid = jnp.kron(eye, w[2])                                # ky = 1: centre (theta-folded)
    b_bot = jnp.kron(s_left, w[3]) + jnp.kron(s_right, w[4])   # ky = 2: taps w3, w4
    return jnp.stack([b_top, b_mid, b_bot], axis=0)            # (3, W*C_in, W*C_out)


def _tpu_budgets():
    """Generation-aware (vmem_budget_bytes, vmem_limit_bytes, num_tensorcores)."""
    cap, cores = None, None
    try:
        info = pltpu.get_tpu_info()
        cap = getattr(info, "vmem_capacity_bytes", None)
        for name in ("num_tensorcores", "tensorcores_per_chip", "num_cores",
                     "core_count"):
            v = getattr(info, name, None)
            if isinstance(v, int) and v > 0:
                cores = v
                break
    except Exception:
        pass
    if cores is None:
        cores = 2                          # conservative: assume megacore (v7x)
    if cap is None:
        cap = 64 << 20                     # assume smallest per-TC VMEM (v7x)
    if cap >= (100 << 20):                 # v5e / v6e: 128 MiB physical
        return 26 << 20, 48 << 20, cores
    return 20 << 20, 32 << 20, cores       # v7x: 64 MiB per TensorCore


def _pick_block_n(n, h, w, c_in, c_out, in_itemsize, vmem_budget_bytes, num_cores):
    """Batch elements per grid step from a generation-aware VMEM budget."""
    k, m = w * c_in, w * c_out
    h_pad = -(-(h + _HALO_OFF + 1) // 8) * 8
    fixed = 2 * 3 * k * m * in_itemsize           # banded weights (double-buffered)
    fixed += 1 << 20                              # Mosaic internal scratch headroom
    per_n = (2 * h * k * in_itemsize              # input block (double-buffered)
             + h_pad * k * in_itemsize            # aligned halo scratch
             + 2 * h * m * 4                      # f32 output block (double-buffered)
             + h * m * 4)                         # f32 accumulator (spill headroom)
    nb = int(max(1, min(n, (vmem_budget_bytes - fixed) // per_n)))
    # Keep >= 2 grid blocks per TensorCore whenever the batch allows it, so
    # input/output DMAs of one block overlap the compute of another on every
    # core under dimension_semantics=("parallel",).  Harmless on v5e/v6e.
    min_blocks = 2 * max(1, num_cores)
    if n > 1:
        nb = min(nb, max(1, -(-n // min_blocks)))
    return nb


def conv2d_diag_cross(x_nchw, weight, theta=0.7, *,
                      compute_dtype=jnp.bfloat16,
                      out_dtype=jnp.float32,
                      block_n=None):
    """x_nchw: (N, C_in, H, W); weight: (C_out, C_in, 1, 5) -> (N, C_out, H, W)."""
    N, C_in, H, W = x_nchw.shape
    C_out = weight.shape[0]
    K, M = W * C_in, W * C_out

    # Downcast before the NCHW -> channels-last transpose so the (remaining)
    # layout op moves half the bytes; the trailing reshape of contiguous minor
    # dims is free.
    # TODO(synk): accept/emit NHWC directly so this transpose fuses into the
    # producer/consumer instead of being a full HBM round trip.
    x_rows = jnp.transpose(x_nchw.astype(compute_dtype), (0, 2, 3, 1)).reshape(N, H, K)

    # bf16 operands keep f32 accumulation inside the kernel (preferred_element_type).
    bands = _build_banded_weights(weight, theta, W).astype(compute_dtype)

    budget, vmem_limit, cores = _tpu_budgets()
    in_itemsize = jnp.dtype(compute_dtype).itemsize
    nb = block_n if block_n is not None else _pick_block_n(
        N, H, W, C_in, C_out, in_itemsize, budget, cores)
    nb = int(min(max(1, nb), N))
    h_pad = -(-(H + _HALO_OFF + 1) // 8) * 8

    out_rows = pl.pallas_call(
        _diag_cross_kernel,
        out_shape=jax.ShapeDtypeStruct((N, H, M), out_dtype),
        grid_spec=pltpu.PrefetchScalarGridSpec(
            num_scalar_prefetch=0,
            grid=(pl.cdiv(N, nb),),
            in_specs=[
                # batch block of interleaved rows
                pl.BlockSpec((nb, H, K), lambda n: (n, 0, 0)),
                # banded weights: constant block index -> fetched once, resident
                pl.BlockSpec((3, K, M), lambda n: (0, 0, 0)),
            ],
            out_specs=pl.BlockSpec((nb, H, M), lambda n: (n, 0, 0)),
            scratch_shapes=[pltpu.VMEM((nb, h_pad, K), compute_dtype)],
        ),
        compiler_params=pltpu.CompilerParams(
            dimension_semantics=("parallel",),
            vmem_limit_bytes=int(vmem_limit)),
    )(x_rows, bands)

    # (N, H, W*C_out) -> (N, H, W, C_out) is a free reshape; back to NCHW.
    return jnp.transpose(out_rows.reshape(N, H, W, C_out), (0, 3, 1, 2))


def _reference(x_nchw, weight, theta=0.7):
    """Pure-JAX reference mirroring the PyTorch forward literally."""
    C_out, C_in, _, _ = weight.shape
    k3 = jnp.zeros((C_out, C_in, 3, 3), jnp.float32)
    for i, (ky, kx) in enumerate(_TAPS):
        k3 = k3.at[:, :, ky, kx].set(weight[:, :, 0, i])
    dn = ("NCHW", "OIHW", "NCHW")
    out_normal = lax.conv_general_dilated(
        x_nchw, k3, window_strides=(1, 1), padding=((1, 1), (1, 1)),
        dimension_numbers=dn)
    kernel_diff = jnp.sum(weight, axis=(2, 3))[:, :, None, None]
    out_diff = lax.conv_general_dilated(
        x_nchw, kernel_diff, window_strides=(1, 1), padding=((0, 0), (0, 0)),
        dimension_numbers=dn)
    return out_normal - theta * out_diff


if __name__ == "__main__":
    key = jax.random.PRNGKey(0)
    k_x, k_w, k_x2 = jax.random.split(key, 3)

    N, C_in, C_out, H, W = 2, 4, 8, 16, 16
    theta = 0.7

    x = jax.random.normal(k_x, (N, C_in, H, W), dtype=jnp.float32)
    # nn.Conv2d(in, out, kernel_size=(1,5), bias=False) -> weight (C_out, C_in, 1, 5)
    weight = jax.random.normal(k_w, (C_out, C_in, 1, 5), dtype=jnp.float32) * 0.1
    ref = _reference(x, weight, theta)

    # 1) f32 operand path: tight tolerance vs the literal reference.
    out_f32 = jax.block_until_ready(
        conv2d_diag_cross(x, weight, theta, compute_dtype=jnp.float32))
    assert out_f32.shape == (N, C_out, H, W), out_f32.shape
    err_f32 = float(jnp.max(jnp.abs(out_f32 - ref)))
    assert jnp.allclose(out_f32, ref, atol=2e-4, rtol=2e-4), err_f32

    # 2) default bf16-operand path (f32 accumulation): loosened tolerance.
    out_bf16 = jax.block_until_ready(conv2d_diag_cross(x, weight, theta))
    err_bf16 = float(jnp.max(jnp.abs(out_bf16 - ref)))
    assert jnp.allclose(out_bf16, ref, atol=3e-2, rtol=3e-2), err_bf16

    # 3) batch not divisible by the block size (partial trailing grid block).
    N2 = 3
    x2 = jax.random.normal(k_x2, (N2, C_in, H, W), dtype=jnp.float32)
    ref2 = _reference(x2, weight, theta)
    out2 = jax.block_until_ready(
        conv2d_diag_cross(x2, weight, theta, compute_dtype=jnp.float32, block_n=2))
    err2 = float(jnp.max(jnp.abs(out2 - ref2)))
    assert jnp.allclose(out2, ref2, atol=2e-4, rtol=2e-4), err2

    print("KERNEL_OK")
</pallas_src>

<mosaic_0001>
module attributes {stable_mosaic.version = 11 : i64} {
  func.func @_diag_cross_kernel(%arg0: i32, %arg1: memref<1x16x64xf32, #tpu.memory_space<vmem>>, %arg2: memref<3x64x128xf32, #tpu.memory_space<vmem>>, %arg3: memref<1x16x128xf32, #tpu.memory_space<vmem>>, %arg4: memref<1x32x64xf32, #tpu.memory_space<vmem>>) attributes {dimension_semantics = [#tpu.dimension_semantics<parallel>], iteration_bounds = array<i64: 2>, scalar_prefetch = 0 : i64, scratch_operands = 1 : i64, tpu.core_type = #tpu.core_type<tc>, window_params = [{transform_indices = @transform_0, window_bounds = array<i64: 1, 16, 64>}, {pipeline_mode = #tpu.pipeline_mode<synchronous>, transform_indices = @transform_1, window_bounds = array<i64: 3, 64, 128>}, {transform_indices = @transform_2, window_bounds = array<i64: 1, 16, 128>}]} {
    %cst = arith.constant 0.000000e+00 : f32
    %0 = vector.broadcast %cst : f32 to vector<1x1x64xf32>
    %c0 = arith.constant 0 : index
    %c7 = arith.constant 7 : index
    %c0_0 = arith.constant 0 : index
    %1 = vector.load %arg4[%c0, %c7, %c0_0] : memref<1x32x64xf32, #tpu.memory_space<vmem>>, vector<1x1x64xf32>
    tpu.vector_store %arg4[%c0, %c7, %c0_0], %0 {strides = array<i32>} : memref<1x32x64xf32, #tpu.memory_space<vmem>>, vector<1x1x64xf32>,
    %c0_1 = arith.constant 0 : index
    %c24 = arith.constant 24 : index
    %c0_2 = arith.constant 0 : index
    %2 = vector.load %arg4[%c0_1, %c24, %c0_2] : memref<1x32x64xf32, #tpu.memory_space<vmem>>, vector<1x1x64xf32>
    tpu.vector_store %arg4[%c0_1, %c24, %c0_2], %0 {strides = array<i32>} : memref<1x32x64xf32, #tpu.memory_space<vmem>>, vector<1x1x64xf32>,
    %c0_3 = arith.constant 0 : index
    %c0_4 = arith.constant 0 : index
    %c0_5 = arith.constant 0 : index
    %3 = vector.load %arg1[%c0_3, %c0_4, %c0_5] : memref<1x16x64xf32, #tpu.memory_space<vmem>>, vector<1x16x64xf32>
    %c0_6 = arith.constant 0 : index
    %c8 = arith.constant 8 : index
    %c0_7 = arith.constant 0 : index
    %4 = vector.load %arg4[%c0_6, %c8, %c0_7] : memref<1x32x64xf32, #tpu.memory_space<vmem>>, vector<1x16x64xf32>
    tpu.vector_store %arg4[%c0_6, %c8, %c0_7], %3 {strides = array<i32>} : memref<1x32x64xf32, #tpu.memory_space<vmem>>, vector<1x16x64xf32>,
    %c0_8 = arith.constant 0 : index
    %c7_9 = arith.constant 7 : index
    %c0_10 = arith.constant 0 : index
    %5 = vector.load %arg4[%c0_8, %c7_9, %c0_10] : memref<1x32x64xf32, #tpu.memory_space<vmem>>, vector<1x16x64xf32>
    %6 = vector.shape_cast %5 : vector<1x16x64xf32> to vector<16x64xf32>
    %c0_11 = arith.constant 0 : index
    %c8_12 = arith.constant 8 : index
    %c0_13 = arith.constant 0 : index
    %7 = vector.load %arg4[%c0_11, %c8_12, %c0_13] : memref<1x32x64xf32, #tpu.memory_space<vmem>>, vector<1x16x64xf32>
    %8 = vector.shape_cast %7 : vector<1x16x64xf32> to vector<16x64xf32>
    %c0_14 = arith.constant 0 : index
    %c9 = arith.constant 9 : index
    %c0_15 = arith.constant 0 : index
    %9 = vector.load %arg4[%c0_14, %c9, %c0_15] : memref<1x32x64xf32, #tpu.memory_space<vmem>>, vector<1x16x64xf32>
    %10 = vector.shape_cast %9 : vector<1x16x64xf32> to vector<16x64xf32>
    %c0_16 = arith.constant 0 : index
    %c0_17 = arith.constant 0 : index
    %c0_18 = arith.constant 0 : index
    %11 = vector.load %arg2[%c0_16, %c0_17, %c0_18] : memref<3x64x128xf32, #tpu.memory_space<vmem>>, vector<1x64x128xf32>
    %12 = vector.shape_cast %11 : vector<1x64x128xf32> to vector<64x128xf32>
    %cst_19 = arith.constant dense<0.000000e+00> : vector<16x128xf32>
    %13 = tpu.matmul %6, %12, %cst_19 {dimension_numbers = #tpu.dot_dimension_numbers<[1], [0], [0], [1], [0, 0, 1, 1], [], []>} : vector<16x64xf32>, vector<64x128xf32>, vector<16x128xf32> -> vector<16x128xf32>
    %c1 = arith.constant 1 : index
    %c0_20 = arith.constant 0 : index
    %c0_21 = arith.constant 0 : index
    %14 = vector.load %arg2[%c1, %c0_20, %c0_21] : memref<3x64x128xf32, #tpu.memory_space<vmem>>, vector<1x64x128xf32>
    %15 = vector.shape_cast %14 : vector<1x64x128xf32> to vector<64x128xf32>
    %cst_22 = arith.constant dense<0.000000e+00> : vector<16x128xf32>
    %16 = tpu.matmul %8, %15, %cst_22 {dimension_numbers = #tpu.dot_dimension_numbers<[1], [0], [0], [1], [0, 0, 1, 1], [], []>} : vector<16x64xf32>, vector<64x128xf32>, vector<16x128xf32> -> vector<16x128xf32>
    %17 = arith.addf %13, %16 : vector<16x128xf32>
    %c2 = arith.constant 2 : index
    %c0_23 = arith.constant 0 : index
    %c0_24 = arith.constant 0 : index
    %18 = vector.load %arg2[%c2, %c0_23, %c0_24] : memref<3x64x128xf32, #tpu.memory_space<vmem>>, vector<1x64x128xf32>
    %19 = vector.shape_cast %18 : vector<1x64x128xf32> to vector<64x128xf32>
    %cst_25 = arith.constant dense<0.000000e+00> : vector<16x128xf32>
    %20 = tpu.matmul %10, %19, %cst_25 {dimension_numbers = #tpu.dot_dimension_numbers<[1], [0], [0], [1], [0, 0, 1, 1], [], []>} : vector<16x64xf32>, vector<64x128xf32>, vector<16x128xf32> -> vector<16x128xf32>
    %21 = arith.addf %17, %20 : vector<16x128xf32>
    %22 = vector.shape_cast %21 : vector<16x128xf32> to vector<1x16x128xf32>
    %c0_26 = arith.constant 0 : index
    %c0_27 = arith.constant 0 : index
    %c0_28 = arith.constant 0 : index
    %23 = vector.load %arg3[%c0_26, %c0_27, %c0_28] : memref<1x16x128xf32, #tpu.memory_space<vmem>>, vector<1x16x128xf32>
    tpu.vector_store %arg3[%c0_26, %c0_27, %c0_28], %22 {strides = array<i32>} : memref<1x16x128xf32, #tpu.memory_space<vmem>>, vector<1x16x128xf32>,
    return
  }
  func.func @transform_0(%arg0: i32) -> (i32, i32, i32) {
    %c0_i32 = arith.constant 0 : i32
    %c0_i32_0 = arith.constant 0 : i32
    %c0_i32_1 = arith.constant 0 : i32
    return %arg0, %c0_i32, %c0_i32_0 : i32, i32, i32
  }
  func.func @transform_1(%arg0: i32) -> (i32, i32, i32) {
    %c0_i32 = arith.constant 0 : i32
    %c0_i32_0 = arith.constant 0 : i32
    %c0_i32_1 = arith.constant 0 : i32
    %c0_i32_2 = arith.constant 0 : i32
    return %c0_i32, %c0_i32_0, %c0_i32_1 : i32, i32, i32
  }
  func.func @transform_2(%arg0: i32) -> (i32, i32, i32) {
    %c0_i32 = arith.constant 0 : i32
    %c0_i32_0 = arith.constant 0 : i32
    %c0_i32_1 = arith.constant 0 : i32
    return %arg0, %c0_i32, %c0_i32_0 : i32, i32, i32
  }
}

</mosaic_0001>

<llo_original>
// kernel: tpu_custom_call.1
$region0: #{tpu_custom_call.1}
  #allocation0 [shape = 'u32[]', space=smem, size = 0x4, offset = 0x4, fixed_abs, tag = 'smem constant byte address 0x4 - core index']
  #allocation1 [shape = 'u32[144,128]{1,0:T(1,128)}', space=vmem, size = 0x12000, scoped, tag = 'internal scratch']
  #allocation2 [shape = 'f32[1,32,64]{2,1,0:T(8,128)}', space=vmem, size = 0x4000, scoped, tag = 'scratch operand']
  %s0 = inlined_call_operand.hbm [shape: f32[2,16,64], index: 0, kind: input, shape index: {}]
  %s1 = inlined_call_operand.hbm [shape: f32[3,64,128], index: 1, kind: input, shape index: {}]
  %s2 = inlined_call_operand.hbm [shape: f32[2,16,128], index: 2, kind: output, shape index: {}]
  %s3 = sld [smem:[#allocation0]]
  $region49: #{tpu_custom_call.1} parent=0
    _
  %s5 = ssub.s32 1, %s3
  %s6 = scalar_select 0, %s5, %s3
  $region1: #{tpu_custom_call.1} parent=0
    #allocation3 [shape = 'u8[16384]{0}', space=vmem, size = 0x4000, scoped, tag = 'input window, operand 0']
    #allocation4 [shape = 's32[2]{0}', space=sflag, size = 0x8, scoped, tag = 'scoped memory for tpu_custom_call.1']
    #allocation5 [shape = 's32[2]{0}', space=sflag, size = 0x8, scoped, tag = 'scoped memory for tpu_custom_call.1']
    #allocation6 [shape = 'u8[98304]{0}', space=vmem, size = 0x18000, scoped, tag = 'input window, operand 1, single buffered']
    #allocation7 [shape = 's32[1]{0}', space=sflag, size = 0x4, scoped, tag = 'scoped memory for tpu_custom_call.1']
    #allocation8 [shape = 'u8[16384]{0}', space=vmem, size = 0x4000, scoped, tag = 'output window, operand 0']
    %7 = vsyncpa [#allocation4], 0
    %s8 = scalar_lea.sflag [#allocation4], 1
    %9 = vsyncpa %s8, 0
    %10 = vsyncpa [#allocation7], 0
    %11 = vsyncpa [#allocation5], 0
    %s12 = scalar_lea.sflag [#allocation5], 1
    %13 = vsyncpa %s12, 0
    loop: start=0, step=1, limit=4
    $region2: #{tpu_custom_call.1} parent=1 // loop_pre_header
      _
    $region3: #{tpu_custom_call.1} parent=1 // loop_header
      %s15 = sphi 0, %s19
      %p16 = scmp.ge.s32.totalorder %s15, 4
      %s25 = sphi 0, %s27
      %s28 = sphi 0, %s25
      %s29 = sphi 0, %s28
      %s45 = sphi 0, %s29
      %s49 = sphi 0, %s49
      %s51 = sphi 0, %s49
      %s52 = sphi 0, %s51
      %s66 = sphi 0, %s52
      %s72 = sphi 0, %s74
      %s75 = sphi 0, %s72
      %s76 = sphi 0, %s75
      %s92 = sphi 0, %s76
    $region4: #{tpu_custom_call.1} parent=1 // loop_header_branch
      %18 = sbr.rel (%p16) target = $region8
    $region5: #{tpu_custom_call.1} parent=1 // loop_body
      %s20 = ssub.s32 %s15, 1
      %s21 = ssub.s32 %s15, 2
      %s22 = sadd.s32 %s15, 1
      %s23 = ssub.s32 %s15, %s22
      %p24 = scmp.eq.s32.totalorder %s23, 0
      %s26 = sadd.s32 %s25, 1
      %s27 = scalar_select %p24, %s25, %s26
      %p30 = pneg %p24
      %p31 = scmp.eq.s32.totalorder %s15, 1
      %p32 = por %p30, %p31
      %p33 = scmp.ne.s32.totalorder %s25, %s28
      %p34 = scmp.eq.s32.totalorder %s15, 0
      %p35 = por %p33, %p34
      %p36 = scmp.ne.s32.totalorder %s25, %s28
      %p37 = scmp.eq.s32.totalorder %s20, 1
      %p38 = por %p36, %p37
      %p39 = scmp.ne.s32.totalorder %s28, %s29
      %p40 = scmp.eq.s32.totalorder %s20, 0
      %p41 = por %p39, %p40
      %p42 = scmp.ne.s32.totalorder %s28, %s29
      %p43 = scmp.eq.s32.totalorder %s21, 1
      %p44 = por %p42, %p43
      %p46 = scmp.ne.s32.totalorder %s29, %s45
      %p47 = scmp.eq.s32.totalorder %s21, 0
      %p48 = por %p46, %p47
      %s50 = sadd.s32 %s49, 1
      %p53 = scmp.eq.s32.totalorder %s15, 1
      %p54 = scmp.ne.s32.totalorder %s49, %s51
      %p55 = scmp.eq.s32.totalorder %s15, 0
      %p56 = por %p54, %p55
      %p57 = scmp.ne.s32.totalorder %s49, %s51
      %p58 = scmp.eq.s32.totalorder %s20, 1
      %p59 = por %p57, %p58
      %p60 = scmp.ne.s32.totalorder %s51, %s52
      %p61 = scmp.eq.s32.totalorder %s20, 0
      %p62 = por %p60, %p61
      %p63 = scmp.ne.s32.totalorder %s51, %s52
      %p64 = scmp.eq.s32.totalorder %s21, 1
      %p65 = por %p63, %p64
      %p67 = scmp.ne.s32.totalorder %s52, %s66
      %p68 = scmp.eq.s32.totalorder %s21, 0
      %p69 = por %p67, %p68
      %s70 = ssub.s32 %s15, %s22
      %p71 = scmp.eq.s32.totalorder %s70, 0
      %s73 = sadd.s32 %s72, 1
      %s74 = scalar_select %p71, %s72, %s73
      %p77 = pneg %p71
      %p78 = scmp.eq.s32.totalorder %s15, 1
      %p79 = por %p77, %p78
      %p80 = scmp.ne.s32.totalorder %s72, %s75
      %p81 = scmp.eq.s32.totalorder %s15, 0
      %p82 = por %p80, %p81
      %p83 = scmp.ne.s32.totalorder %s72, %s75
      %p84 = scmp.eq.s32.totalorder %s20, 1
      %p85 = por %p83, %p84
      %p86 = scmp.ne.s32.totalorder %s75, %s76
      %p87 = scmp.eq.s32.totalorder %s20, 0
      %p88 = por %p86, %p87
      %p89 = scmp.ne.s32.totalorder %s75, %s76
      %p90 = scmp.eq.s32.totalorder %s21, 1
      %p91 = por %p89, %p90
      %p93 = scmp.ne.s32.totalorder %s76, %s92
      %p94 = scmp.eq.s32.totalorder %s21, 0
      %p95 = por %p93, %p94
      %p96 = scmp.le.s32.totalorder 1, %s15
      %p97 = scmp.lt.s32.totalorder %s15, 3
      %p98 = pnand %p96, %p97
      %p99 = pneg %p98
      // Predicated region
      $region9: #{tpu_custom_call.1} parent=5 // pred_check
        _
      $region10: #{tpu_custom_call.1} parent=5 // pred_check_branch
        %101 = sbr.rel (%p98) target = $region12
      $region11: #{tpu_custom_call.1} parent=5 // pred_region
        %s102 = ssub.s32 %s15, 1
        // Predicated region
        $region13: #{tpu_custom_call.1} parent=11 // pred_check
          %p103 = pneg %p62
        $region14: #{tpu_custom_call.1} parent=11 // pred_check_branch
          %105 = sbr.rel (%p103) target = $region16
        $region15: #{tpu_custom_call.1} parent=11 // pred_region
          %s107 = ssub.s32 3072, 3072
          %108 = vsyncadd [#allocation7], %s107
          %s109 = sshll.u32 [#allocation6], 4
          %s110 = int_to_ptr.vmem [resolvable:$true] %s109
          %115 = dma.hbm_to_vmem [thread:$0]  %s1, 3072, %s110, [#allocation7], 128, 128, 8
        $region16: #{tpu_custom_call.1} parent=11 // pred_fallthru
          _
      $region12: #{tpu_custom_call.1} parent=5 // pred_fallthru
        _
      %p116 = scmp.lt.s32.totalorder %s15, 2
      // Predicated region
      $region17: #{tpu_custom_call.1} parent=5 // pred_check
        %p117 = pneg %p116
      $region18: #{tpu_custom_call.1} parent=5 // pred_check_branch
        %119 = sbr.rel (%p117) target = $region20
      $region19: #{tpu_custom_call.1} parent=5 // pred_region
        // Predicated region
        $region21: #{tpu_custom_call.1} parent=19 // pred_check
          %p120 = pneg %p35
        $region22: #{tpu_custom_call.1} parent=19 // pred_check_branch
          %122 = sbr.rel (%p120) target = $region24
        $region23: #{tpu_custom_call.1} parent=19 // pred_region
          %s123 = sand.u32 %s25, 1
          %s124 = scalar_lea.sflag [#allocation4], %s123
          %s125 = sand.u32 %s25, 1
          %s126 = smul.addr %s125, 16
          %s127 = scalar_lea.vmem [#allocation3], %s126
          %s129 = ssub.s32 256, 256
          %130 = vsyncadd %s124, %s129
          %s131 = smul.addr %s15, 2
          %s132 = smul.addr %s131, 128
          %s133 = scalar_lea.hbm %s0, %s132
          %s134 = sshll.u32 %s127, 4
          %s135 = int_to_ptr.vmem [resolvable:$true] %s134
          %140 = dma.hbm_to_vmem [thread:$0]  %s133, 256, %s135, %s124, 128, 128, 8
        $region24: #{tpu_custom_call.1} parent=19 // pred_fallthru
          _
      $region20: #{tpu_custom_call.1} parent=5 // pred_fallthru
        _
      %p141 = scmp.le.s32.totalorder 1, %s15
      %p142 = scmp.lt.s32.totalorder %s15, 3
      %p143 = pnand %p141, %p142
      %p144 = pneg %p143
      // Predicated region
      $region25: #{tpu_custom_call.1} parent=5 // pred_check
        _
      $region26: #{tpu_custom_call.1} parent=5 // pred_check_branch
        %146 = sbr.rel (%p143) target = $region28
      $region27: #{tpu_custom_call.1} parent=5 // pred_region
        %s147 = ssub.s32 %s15, 1
        %s148 = sand.u32 %s28, 1
        %s149 = scalar_lea.sflag [#allocation4], %s148
        %s150 = sand.u32 %s28, 1
        %s151 = smul.addr %s150, 16
        %s152 = scalar_lea.vmem [#allocation3], %s151
        // Predicated region
        $region29: #{tpu_custom_call.1} parent=27 // pred_check
          %p153 = pneg %p41
        $region30: #{tpu_custom_call.1} parent=27 // pred_check_branch
          %155 = sbr.rel (%p153) target = $region32
        $region31: #{tpu_custom_call.1} parent=27 // pred_region
          %156 = dma.done %s149, 256
        $region32: #{tpu_custom_call.1} parent=27 // pred_fallthru
          _
        // Predicated region
        $region33: #{tpu_custom_call.1} parent=27 // pred_check
          %p157 = pneg %p62
        $region34: #{tpu_custom_call.1} parent=27 // pred_check_branch
          %159 = sbr.rel (%p157) target = $region36
        $region35: #{tpu_custom_call.1} parent=27 // pred_region
          %160 = dma.done [#allocation7], 3072
        $region36: #{tpu_custom_call.1} parent=27 // pred_fallthru
          _
        %s161 = sand.u32 %s28, 1
        %s162 = scalar_lea.sflag [#allocation4], %s161
        %s163 = sand.u32 %s28, 1
        %s164 = smul.addr %s163, 16
        %s165 = scalar_lea.vmem [#allocation3], %s164
        %p166 = pneg %p41
        %p167 = pneg %p38
        %p168 = pneg %p62
        %p169 = pneg %p59
        %p170 = pneg %p88
        %p171 = pneg %p85
        %s172 = sand.u32 %s75, 1
        %s173 = scalar_lea.sflag [#allocation5], %s172
        %s174 = sand.u32 %s75, 1
        %s175 = smul.addr %s174, 16
        %s176 = scalar_lea.vmem [#allocation8], %s175
        %vm177 = vcmask 516096
        %178 = vst.msk [vmem:[#allocation2 + $0x7] sm:$0x1] %vm177, 0.0
        %179 = vst.msk [vmem:[#allocation2 + $0x18] sm:$0x1] %vm177, 0.0
        %v180 = vld [vmem:[%s152] sm:$0xff]
        %v181 = vld [vmem:[%s152 + $0x8] sm:$0xff]
        %vm182 = vcmask 523264
        %183 = vst.msk [vmem:[#allocation2 + $0x8] sm:$0xff] %vm182, %v180
        %184 = vst.msk [vmem:[#allocation2 + $0x10] sm:$0xff] %vm182, %v181
        %v185 = vld [vmem:[#allocation2 + $0x7] sm:$0xff]
        %v186 = vld [vmem:[#allocation2 + $0xf] sm:$0xff]
        %v187 = vld [vmem:[#allocation2 + $0x8] sm:$0xff]
        %v188 = vld [vmem:[#allocation2 + $0x10] sm:$0xff]
        %v189 = vld [vmem:[#allocation2 + $0x9] sm:$0xff]
        %v190 = vld [vmem:[#allocation2 + $0x11] sm:$0xff]
        %v191 = vld [vmem:[#allocation6] sm:$0xff]
        %v192 = vld [vmem:[#allocation6 + $0x8] sm:$0xff]
        %v193 = vld [vmem:[#allocation6 + $0x10] sm:$0xff]
        %v194 = vld [vmem:[#allocation6 + $0x18] sm:$0xff]
        %v195 = vld [vmem:[#allocation6 + $0x20] sm:$0xff]
        %v196 = vld [vmem:[#allocation6 + $0x28] sm:$0xff]
        %v197 = vld [vmem:[#allocation6 + $0x30] sm:$0xff]
        %v198 = vld [vmem:[#allocation6 + $0x38] sm:$0xff]
        %s199 = scalar_lea.vmem [#allocation6], 64
        %v200 = vld [vmem:[%s199] sm:$0xff]
        %v201 = vld [vmem:[%s199 + $0x8] sm:$0xff]
        %v202 = vld [vmem:[%s199 + $0x10] sm:$0xff]
        %v203 = vld [vmem:[%s199 + $0x18] sm:$0xff]
        %v204 = vld [vmem:[%s199 + $0x20] sm:$0xff]
        %v205 = vld [vmem:[%s199 + $0x28] sm:$0xff]
        %v206 = vld [vmem:[%s199 + $0x30] sm:$0xff]
        %v207 = vld [vmem:[%s199 + $0x38] sm:$0xff]
        %v209 = vsel %vm182, %v187, 0
        %v212 = vsel %vm182, %v188, 0
        %214 = vmatprep.subr.mxu0 0.0
        %215 = vmatpush1.msra.mxu0 %v200
        %216 = vmatprep.subr.mxu0 0.0
        %217 = vmatpush1.msra.mxu0 %v201
        %218 = vmatprep.subr.mxu0 0.0
        %219 = vmatpush1.msra.mxu0 %v202
        %220 = vmatprep.subr.mxu0 0.0
        %221 = vmatpush1.msra.mxu0 %v203
        %222 = vmatprep.subr.mxu0 0.0
        %223 = vmatpush1.msra.mxu0 %v204
        %224 = vmatprep.subr.mxu0 0.0
        %225 = vmatpush1.msra.mxu0 %v205
        %226 = vmatprep.subr.mxu0 0.0
        %227 = vmatpush1.msra.mxu0 %v206
        %228 = vmatprep.subr.mxu0 0.0
        %229 = vmatpush1.msra.mxu0 %v207
        %230 = vmatprep.subr.mxu0 0.0
        %231 = vmatpush1.msra.mxu0 0.0
        %232 = vmatprep.subr.mxu0 0.0
        %233 = vmatpush1.msra.mxu0 0.0
        %234 = vmatprep.subr.mxu0 0.0
        %235 = vmatpush1.msra.mxu0 0.0
        %236 = vmatprep.subr.mxu0 0.0
        %237 = vmatpush1.msra.mxu0 0.0
        %238 = vmatprep.subr.mxu0 0.0
        %239 = vmatpush1.msra.mxu0 0.0
        %240 = vmatprep.subr.mxu0 0.0
        %241 = vmatpush1.msra.mxu0 0.0
        %242 = vmatprep.subr.mxu0 0.0
        %243 = vmatpush1.msra.mxu0 0.0
        %244 = vmatprep.subr.mxu0 0.0
        %245 = vmatpush1.msra.mxu0 0.0
        %246 = vmatprep.subr.mxu0 0.0
        %247 = vmatpush1.msra.mxu0 0.0
        %248 = vmatprep.subr.mxu0 0.0
        %249 = vmatpush1.msra.mxu0 0.0
        %250 = vmatprep.subr.mxu0 0.0
        %251 = vmatpush1.msra.mxu0 0.0
        %252 = vmatprep.subr.mxu0 0.0
        %253 = vmatpush1.msra.mxu0 0.0
        %254 = vmatprep.subr.mxu0 0.0
        %255 = vmatpush1.msra.mxu0 0.0
        %256 = vmatprep.subr.mxu0 0.0
        %257 = vmatpush1.msra.mxu0 0.0
        %258 = vmatprep.subr.mxu0 0.0
        %259 = vmatpush1.msra.mxu0 0.0
        %260 = vmatprep.subr.mxu0 0.0
        %261 = vmatpush1.msra.mxu0 0.0
        %262 = vmatprep.subr.mxu0 0.0
        %263 = vmatpush1.msra.mxu0 0.0
        %264 = vmatprep.subr.mxu0 0.0
        %265 = vmatpush1.msra.mxu0 0.0
        %266 = vmatprep.subr.mxu0 0.0
        %267 = vmatpush1.msra.mxu0 0.0
        %268 = vmatprep.subr.mxu0 0.0
        %269 = vmatpush1.msra.mxu0 0.0
        %270 = vmatprep.subr.mxu0 0.0
        %271 = vmatpush1.msra.mxu0 0.0
        %272 = vmatprep.subr.mxu0 0.0
        %273 = vmatpush1.msra.mxu0 0.0
        %274 = vmatprep.subr.mxu0 0.0
        %275 = vmatpush1.msra.mxu0 0.0
        %276 = vmatprep.subr.mxu0 0.0
        %277 = vmatpush1.msra.mxu0 0.0
        %278 = vmatprep.mubr.f32.mxu0 0.0
        %279 = vmatmul.mubr.f32.gmra.mrb[0].mxu0 %v209
        %v280 = vpop.f32.mrb[0].mxu0
        %v281 = vadd.f32 0.0, %v280
        %v282 = vpop.f32.mrb[0].mxu0
        %283 = vmatprep.mubr.f32.mxu0 0.0
        %284 = vmatmul.mubr.f32.gmra.mrb[0].mxu0 %v212
        %v285 = vpop.f32.mrb[0].mxu0
        %v286 = vadd.f32 0.0, %v285
        %v287 = vpop.f32.mrb[0].mxu0
        %288 = vdwg.mxu0
        %v290 = vsel %vm182, %v185, 0
        %v293 = vsel %vm182, %v186, 0
        %295 = vmatprep.subr.mxu0 0.0
        %296 = vmatpush1.msra.mxu0 %v191
        %297 = vmatprep.subr.mxu0 0.0
        %298 = vmatpush1.msra.mxu0 %v192
        %299 = vmatprep.subr.mxu0 0.0
        %300 = vmatpush1.msra.mxu0 %v193
        %301 = vmatprep.subr.mxu0 0.0
        %302 = vmatpush1.msra.mxu0 %v194
        %303 = vmatprep.subr.mxu0 0.0
        %304 = vmatpush1.msra.mxu0 %v195
        %305 = vmatprep.subr.mxu0 0.0
        %306 = vmatpush1.msra.mxu0 %v196
        %307 = vmatprep.subr.mxu0 0.0
        %308 = vmatpush1.msra.mxu0 %v197
        %309 = vmatprep.subr.mxu0 0.0
        %310 = vmatpush1.msra.mxu0 %v198
        %311 = vmatprep.subr.mxu0 0.0
        %312 = vmatpush1.msra.mxu0 0.0
        %313 = vmatprep.subr.mxu0 0.0
        %314 = vmatpush1.msra.mxu0 0.0
        %315 = vmatprep.subr.mxu0 0.0
        %316 = vmatpush1.msra.mxu0 0.0
        %317 = vmatprep.subr.mxu0 0.0
        %318 = vmatpush1.msra.mxu0 0.0
        %319 = vmatprep.subr.mxu0 0.0
        %320 = vmatpush1.msra.mxu0 0.0
        %321 = vmatprep.subr.mxu0 0.0
        %322 = vmatpush1.msra.mxu0 0.0
        %323 = vmatprep.subr.mxu0 0.0
        %324 = vmatpush1.msra.mxu0 0.0
        %325 = vmatprep.subr.mxu0 0.0
        %326 = vmatpush1.msra.mxu0 0.0
        %327 = vmatprep.subr.mxu0 0.0
        %328 = vmatpush1.msra.mxu0 0.0
        %329 = vmatprep.subr.mxu0 0.0
        %330 = vmatpush1.msra.mxu0 0.0
        %331 = vmatprep.subr.mxu0 0.0
        %332 = vmatpush1.msra.mxu0 0.0
        %333 = vmatprep.subr.mxu0 0.0
        %334 = vmatpush1.msra.mxu0 0.0
        %335 = vmatprep.subr.mxu0 0.0
        %336 = vmatpush1.msra.mxu0 0.0
        %337 = vmatprep.subr.mxu0 0.0
        %338 = vmatpush1.msra.mxu0 0.0
        %339 = vmatprep.subr.mxu0 0.0
        %340 = vmatpush1.msra.mxu0 0.0
        %341 = vmatprep.subr.mxu0 0.0
        %342 = vmatpush1.msra.mxu0 0.0
        %343 = vmatprep.subr.mxu0 0.0
        %344 = vmatpush1.msra.mxu0 0.0
        %345 = vmatprep.subr.mxu0 0.0
        %346 = vmatpush1.msra.mxu0 0.0
        %347 = vmatprep.subr.mxu0 0.0
        %348 = vmatpush1.msra.mxu0 0.0
        %349 = vmatprep.subr.mxu0 0.0
        %350 = vmatpush1.msra.mxu0 0.0
        %351 = vmatprep.subr.mxu0 0.0
        %352 = vmatpush1.msra.mxu0 0.0
        %353 = vmatprep.subr.mxu0 0.0
        %354 = vmatpush1.msra.mxu0 0.0
        %355 = vmatprep.subr.mxu0 0.0
        %356 = vmatpush1.msra.mxu0 0.0
        %357 = vmatprep.subr.mxu0 0.0
        %358 = vmatpush1.msra.mxu0 0.0
        %359 = vmatprep.mubr.f32.mxu0 0.0
        %360 = vmatmul.mubr.f32.gmra.mrb[0].mxu0 %v290
        %v361 = vpop.f32.mrb[0].mxu0
        %v362 = vadd.f32 %v281, %v361
        %v363 = vpop.f32.mrb[0].mxu0
        %364 = vmatprep.mubr.f32.mxu0 0.0
        %365 = vmatmul.mubr.f32.gmra.mrb[0].mxu0 %v293
        %v366 = vpop.f32.mrb[0].mxu0
        %v367 = vadd.f32 %v286, %v366
        %v368 = vpop.f32.mrb[0].mxu0
        %369 = vdwg.mxu0
        %s370 = scalar_lea.vmem [#allocation6], 128
        %v371 = vld [vmem:[%s370] sm:$0xff]
        %v372 = vld [vmem:[%s370 + $0x8] sm:$0xff]
        %v373 = vld [vmem:[%s370 + $0x10] sm:$0xff]
        %v374 = vld [vmem:[%s370 + $0x18] sm:$0xff]
        %v375 = vld [vmem:[%s370 + $0x20] sm:$0xff]
        %v376 = vld [vmem:[%s370 + $0x28] sm:$0xff]
        %v377 = vld [vmem:[%s370 + $0x30] sm:$0xff]
        %v378 = vld [vmem:[%s370 + $0x38] sm:$0xff]
        %v380 = vsel %vm182, %v189, 0
        %v383 = vsel %vm182, %v190, 0
        %385 = vmatprep.subr.mxu0 0.0
        %386 = vmatpush1.msra.mxu0 %v371
        %387 = vmatprep.subr.mxu0 0.0
        %388 = vmatpush1.msra.mxu0 %v372
        %389 = vmatprep.subr.mxu0 0.0
        %390 = vmatpush1.msra.mxu0 %v373
        %391 = vmatprep.subr.mxu0 0.0
        %392 = vmatpush1.msra.mxu0 %v374
        %393 = vmatprep.subr.mxu0 0.0
        %394 = vmatpush1.msra.mxu0 %v375
        %395 = vmatprep.subr.mxu0 0.0
        %396 = vmatpush1.msra.mxu0 %v376
        %397 = vmatprep.subr.mxu0 0.0
        %398 = vmatpush1.msra.mxu0 %v377
        %399 = vmatprep.subr.mxu0 0.0
        %400 = vmatpush1.msra.mxu0 %v378
        %401 = vmatprep.subr.mxu0 0.0
        %402 = vmatpush1.msra.mxu0 0.0
        %403 = vmatprep.subr.mxu0 0.0
        %404 = vmatpush1.msra.mxu0 0.0
        %405 = vmatprep.subr.mxu0 0.0
        %406 = vmatpush1.msra.mxu0 0.0
        %407 = vmatprep.subr.mxu0 0.0
        %408 = vmatpush1.msra.mxu0 0.0
        %409 = vmatprep.subr.mxu0 0.0
        %410 = vmatpush1.msra.mxu0 0.0
        %411 = vmatprep.subr.mxu0 0.0
        %412 = vmatpush1.msra.mxu0 0.0
        %413 = vmatprep.subr.mxu0 0.0
        %414 = vmatpush1.msra.mxu0 0.0
        %415 = vmatprep.subr.mxu0 0.0
        %416 = vmatpush1.msra.mxu0 0.0
        %417 = vmatprep.subr.mxu0 0.0
        %418 = vmatpush1.msra.mxu0 0.0
        %419 = vmatprep.subr.mxu0 0.0
        %420 = vmatpush1.msra.mxu0 0.0
        %421 = vmatprep.subr.mxu0 0.0
        %422 = vmatpush1.msra.mxu0 0.0
        %423 = vmatprep.subr.mxu0 0.0
        %424 = vmatpush1.msra.mxu0 0.0
        %425 = vmatprep.subr.mxu0 0.0
        %426 = vmatpush1.msra.mxu0 0.0
        %427 = vmatprep.subr.mxu0 0.0
        %428 = vmatpush1.msra.mxu0 0.0
        %429 = vmatprep.subr.mxu0 0.0
        %430 = vmatpush1.msra.mxu0 0.0
        %431 = vmatprep.subr.mxu0 0.0
        %432 = vmatpush1.msra.mxu0 0.0
        %433 = vmatprep.subr.mxu0 0.0
        %434 = vmatpush1.msra.mxu0 0.0
        %435 = vmatprep.subr.mxu0 0.0
        %436 = vmatpush1.msra.mxu0 0.0
        %437 = vmatprep.subr.mxu0 0.0
        %438 = vmatpush1.msra.mxu0 0.0
        %439 = vmatprep.subr.mxu0 0.0
        %440 = vmatpush1.msra.mxu0 0.0
        %441 = vmatprep.subr.mxu0 0.0
        %442 = vmatpush1.msra.mxu0 0.0
        %443 = vmatprep.subr.mxu0 0.0
        %444 = vmatpush1.msra.mxu0 0.0
        %445 = vmatprep.subr.mxu0 0.0
        %446 = vmatpush1.msra.mxu0 0.0
        %447 = vmatprep.subr.mxu0 0.0
        %448 = vmatpush1.msra.mxu0 0.0
        %449 = vmatprep.mubr.f32.mxu0 0.0
        %450 = vmatmul.mubr.f32.gmra.mrb[0].mxu0 %v380
        %v451 = vpop.f32.mrb[0].mxu0
        %v452 = vadd.f32 0.0, %v451
        %v453 = vpop.f32.mrb[0].mxu0
        %454 = vmatprep.mubr.f32.mxu0 0.0
        %455 = vmatmul.mubr.f32.gmra.mrb[0].mxu0 %v383
        %v456 = vpop.f32.mrb[0].mxu0
        %v457 = vadd.f32 0.0, %v456
        %v458 = vpop.f32.mrb[0].mxu0
        %459 = vdwg.mxu0
        %v460 = vadd.f32 %v362, %v452
        %v461 = vadd.f32 %v367, %v457
        %462 = vst [vmem:[%s176] sm:$0xff] %v460
        %463 = vst [vmem:[%s176 + $0x8] sm:$0xff] %v461
        %s464 = sand.u32 %s75, 1
        %s465 = scalar_lea.sflag [#allocation5], %s464
        %s466 = sand.u32 %s75, 1
        %s467 = smul.addr %s466, 16
        %s468 = scalar_lea.vmem [#allocation8], %s467
        // Predicated region
        $region37: #{tpu_custom_call.1} parent=27 // pred_check
          %p469 = pneg %p85
        $region38: #{tpu_custom_call.1} parent=27 // pred_check_branch
          %471 = sbr.rel (%p469) target = $region40
        $region39: #{tpu_custom_call.1} parent=27 // pred_region
          %s473 = ssub.s32 256, 256
          %474 = vsyncadd %s465, %s473
          %s475 = smul.addr %s20, 2
          %s476 = smul.addr %s475, 128
          %s477 = scalar_lea.hbm %s2, %s476
          %s478 = sshll.u32 %s468, 4
          %s479 = int_to_ptr.vmem [resolvable:$true] %s478
          %484 = dma.vmem_to_hbm [thread:$0]  %s479, 256, %s477, %s465, 128, 128, 8
        $region40: #{tpu_custom_call.1} parent=27 // pred_fallthru
          _
      $region28: #{tpu_custom_call.1} parent=5 // pred_fallthru
        _
      %p485 = scmp.le.s32.totalorder 2, %s15
      // Predicated region
      $region41: #{tpu_custom_call.1} parent=5 // pred_check
        %p486 = pneg %p485
      $region42: #{tpu_custom_call.1} parent=5 // pred_check_branch
        %488 = sbr.rel (%p486) target = $region44
      $region43: #{tpu_custom_call.1} parent=5 // pred_region
        %s489 = ssub.s32 %s15, 2
        // Predicated region
        $region45: #{tpu_custom_call.1} parent=43 // pred_check
          %p490 = pneg %p91
        $region46: #{tpu_custom_call.1} parent=43 // pred_check_branch
          %492 = sbr.rel (%p490) target = $region48
        $region47: #{tpu_custom_call.1} parent=43 // pred_region
          %s493 = sand.u32 %s76, 1
          %s494 = scalar_lea.sflag [#allocation5], %s493
          %s495 = sand.u32 %s76, 1
          %s496 = smul.addr %s495, 16
          %s497 = scalar_lea.vmem [#allocation8], %s496
          %498 = dma.done %s494, 256
        $region48: #{tpu_custom_call.1} parent=43 // pred_fallthru
          _
      $region44: #{tpu_custom_call.1} parent=5 // pred_fallthru
        _
    $region6: #{tpu_custom_call.1} parent=1 // loop_footer
      %s19 = sadd.s32 1, %s15
    $region7: #{tpu_custom_call.1} parent=1 // loop_footer_branch
      %14 = sbr.rel target = $region3
    $region8: #{tpu_custom_call.1} parent=1 // loop_exit
      _
    %499 = vsyncpa [#allocation4], 1
    %s500 = scalar_lea.sflag [#allocation4], 1
    %501 = vsyncpa %s500, 1
    %502 = vsyncpa [#allocation7], 1
    %503 = vsyncpa [#allocation5], 1
    %s504 = scalar_lea.sflag [#allocation5], 1
    %505 = vsyncpa %s504, 1

</llo_original>
